<compile_context>
chip_gen: v7x
topology: tpu7x:2x2x1
jax: 0.10.0
libtpu: 0.0.40
codegen_flags: <defaults>
</compile_context>

<pallas_src>
import jax
import jax.numpy as jnp
from jax.experimental import pallas as pl
from jax.experimental.pallas import tpu as pltpu


def _make_rotary_kernel(ts_orig):
    """ts_orig = number of original (un-folded) positions per grid step."""

    def kernel(invf_ref, cosd_ref, sind_ref, cos_ref, sin_ref):
        # invf_ref : (1,  W) f32  inv_freq tiled R times along lanes (resident)
        # cosd_ref : (TR, W) f32  cos of within-tile delta angles    (resident)
        # sind_ref : (TR, W) f32  sin of within-tile delta angles    (resident)
        # cos_ref/sin_ref : (TR, W) bf16 lane-folded outputs
        base = (pl.program_id(0) * ts_orig).astype(jnp.float32)
        b = base * invf_ref[...]            # (1, W) per-tile base phase
        cb = jnp.cos(b)                     # EUP: only 2*W transcendentals/step
        sb = jnp.sin(b)
        cd = cosd_ref[...]
        sd = sind_ref[...]
        # Angle addition -> pure VPU mul/add per element, straight to bf16 store.
        cos_ref[...] = (cb * cd - sb * sd).astype(jnp.bfloat16)
        sin_ref[...] = (sb * cd + cb * sd).astype(jnp.bfloat16)

    return kernel


def _lane_fold_factor(half):
    # Smallest R making the folded lane width a multiple of 128 (dense stores).
    for r in (1, 2, 4, 8, 16):
        if (r * half) % 128 == 0:
            return r
    return 1  # fallback: masked partial stores for odd head dims (rare)


def rotary_pallas(x, inv_freq):
    """Compute (cos, sin) caches like torch Rotary.forward.

    x:        [B, T, H, D]  (only T is used, statically)
    inv_freq: [D//2]        float32
    returns:  (cos, sin) each [1, T, 1, D//2] bfloat16
    """
    seq_len = int(x.shape[1])
    half = int(inv_freq.shape[0])

    R = _lane_fold_factor(half)
    W = R * half                                 # folded lane width (>=128 typ.)
    t_fold = -(-seq_len // R)                    # folded rows = cdiv(T, R)

    # Folded rows per grid step: ~4096 original positions/step, but keep >=4
    # grid steps when possible (v7x 2-TC sharding) and a multiple of 16 (bf16
    # sublane packing).  Tiny caches -> single whole-array tile.
    if t_fold <= 16:
        tr = t_fold
    else:
        cap = max(16, 4096 // R)
        tr = min(cap, max(16, -(-t_fold // 4)))
        tr = ((tr + 15) // 16) * 16
    ts_orig = tr * R                             # original positions per step
    grid = (pl.cdiv(t_fold, tr),)

    # ---- tiny resident tables, computed once in the wrapper: O(tr * W) ----
    invf = inv_freq.astype(jnp.float32)
    invf_tiled = jnp.tile(invf, (R,)).reshape(1, W)            # [invf|invf|..]
    j_off = jnp.repeat(jnp.arange(R, dtype=jnp.float32), half).reshape(1, W)
    s_off = (jnp.arange(tr, dtype=jnp.float32) * R).reshape(tr, 1)
    delta = (s_off + j_off) * invf_tiled                        # (tr, W)
    cos_d = jnp.cos(delta)
    sin_d = jnp.sin(delta)

    const_row = pl.BlockSpec((1, W), lambda i: (0, 0))     # resident, no re-DMA
    const_tab = pl.BlockSpec((tr, W), lambda i: (0, 0))    # resident, no re-DMA
    out_spec = pl.BlockSpec((tr, W), lambda i: (i, 0))

    cos_f, sin_f = pl.pallas_call(
        _make_rotary_kernel(ts_orig),
        out_shape=(
            jax.ShapeDtypeStruct((t_fold, W), jnp.bfloat16),
            jax.ShapeDtypeStruct((t_fold, W), jnp.bfloat16),
        ),
        grid=grid,
        in_specs=[const_row, const_tab, const_tab],
        out_specs=(out_spec, out_spec),
        compiler_params=pltpu.CompilerParams(
            dimension_semantics=("parallel",),
            vmem_limit_bytes=32 * 1024 * 1024,
        ),
    )(invf_tiled, cos_d, sin_d)

    # Lane-unfold: contiguous row-major reshape (free), then trim pad rows.
    cos = cos_f.reshape(t_fold * R, half)
    sin = sin_f.reshape(t_fold * R, half)
    if t_fold * R != seq_len:
        cos = cos[:seq_len]
        sin = sin[:seq_len]
    # Match torch's  cos_cached[None, :, None, :]
    return cos[None, :, None, :], sin[None, :, None, :]


def make_inv_freq(dim, base=10000.0):
    # 1.0 / base ** (arange(0, dim, 2) / dim)  — deterministic, no checkpoint.
    return 1.0 / (base ** (jnp.arange(0, dim, 2, dtype=jnp.float32) / dim))


def _reference(seq_len, inv_freq):
    t = jnp.arange(seq_len, dtype=jnp.float32)
    freqs = jnp.outer(t, inv_freq)
    ref_cos = jnp.cos(freqs).astype(jnp.bfloat16)[None, :, None, :]
    ref_sin = jnp.sin(freqs).astype(jnp.bfloat16)[None, :, None, :]
    return ref_cos, ref_sin


if __name__ == "__main__":
    key = jax.random.PRNGKey(0)

    # TODO(synk): the torch module's cross-call seq_len cache is stateful;
    # here the cache is recomputed per call (stateless JAX).

    # --- small-shape check (matches the module's expected layout) ---
    B, T, H, D = 2, 8, 4, 32          # x: [batch, seq, heads, head_dim]
    x = jax.random.normal(key, (B, T, H, D), dtype=jnp.float32)
    inv_freq = make_inv_freq(D)

    cos, sin = rotary_pallas(x, inv_freq)
    cos, sin = jax.block_until_ready((cos, sin))

    ref_cos, ref_sin = _reference(T, inv_freq)
    assert cos.shape == (1, T, 1, D // 2) and cos.dtype == jnp.bfloat16
    assert sin.shape == (1, T, 1, D // 2) and sin.dtype == jnp.bfloat16
    assert jnp.allclose(cos.astype(jnp.float32), ref_cos.astype(jnp.float32),
                        atol=1e-2, rtol=1e-2)
    assert jnp.allclose(sin.astype(jnp.float32), ref_sin.astype(jnp.float32),
                        atol=1e-2, rtol=1e-2)

    # --- secondary check: tiled grid, lane folding, partial last tile,
    #     and seq_len not a multiple of the fold factor ---
    T2, D2 = 2065, 64
    x2 = jnp.zeros((1, T2, 1, D2), dtype=jnp.float32)
    inv_freq2 = make_inv_freq(D2)
    cos2, sin2 = rotary_pallas(x2, inv_freq2)
    cos2, sin2 = jax.block_until_ready((cos2, sin2))
    ref_cos2, ref_sin2 = _reference(T2, inv_freq2)
    assert cos2.shape == (1, T2, 1, D2 // 2)
    assert jnp.allclose(cos2.astype(jnp.float32), ref_cos2.astype(jnp.float32),
                        atol=1e-2, rtol=1e-2)
    assert jnp.allclose(sin2.astype(jnp.float32), ref_sin2.astype(jnp.float32),
                        atol=1e-2, rtol=1e-2)

    print("KERNEL_OK")
</pallas_src>

<mosaic_0001>
module attributes {stable_mosaic.version = 11 : i64} {
  func.func @kernel(%arg0: i32, %arg1: memref<1x128xf32, #tpu.memory_space<vmem>>, %arg2: memref<1x128xf32, #tpu.memory_space<vmem>>, %arg3: memref<1x128xf32, #tpu.memory_space<vmem>>, %arg4: memref<1x128xbf16, #tpu.memory_space<vmem>>, %arg5: memref<1x128xbf16, #tpu.memory_space<vmem>>) attributes {dimension_semantics = [#tpu.dimension_semantics<parallel>], iteration_bounds = array<i64: 1>, scalar_prefetch = 0 : i64, scratch_operands = 0 : i64, tpu.core_type = #tpu.core_type<tc>, window_params = [{pipeline_mode = #tpu.pipeline_mode<synchronous>, transform_indices = @transform_0, window_bounds = array<i64: 1, 128>}, {pipeline_mode = #tpu.pipeline_mode<synchronous>, transform_indices = @transform_1, window_bounds = array<i64: 1, 128>}, {pipeline_mode = #tpu.pipeline_mode<synchronous>, transform_indices = @transform_2, window_bounds = array<i64: 1, 128>}, {transform_indices = @transform_3, window_bounds = array<i64: 1, 128>}, {transform_indices = @transform_4, window_bounds = array<i64: 1, 128>}]} {
    %c8_i32 = arith.constant 8 : i32
    %0 = arith.muli %arg0, %c8_i32 : i32
    %1 = arith.sitofp %0 : i32 to f32
    %c0 = arith.constant 0 : index
    %c0_0 = arith.constant 0 : index
    %2 = vector.load %arg1[%c0, %c0_0] : memref<1x128xf32, #tpu.memory_space<vmem>>, vector<1x128xf32>
    %3 = vector.broadcast %1 : f32 to vector<1x128xf32>
    %4 = arith.mulf %3, %2 : vector<1x128xf32>
    %5 = math.cos %4 : vector<1x128xf32>
    %6 = math.sin %4 : vector<1x128xf32>
    %c0_1 = arith.constant 0 : index
    %c0_2 = arith.constant 0 : index
    %7 = vector.load %arg2[%c0_1, %c0_2] : memref<1x128xf32, #tpu.memory_space<vmem>>, vector<1x128xf32>
    %c0_3 = arith.constant 0 : index
    %c0_4 = arith.constant 0 : index
    %8 = vector.load %arg3[%c0_3, %c0_4] : memref<1x128xf32, #tpu.memory_space<vmem>>, vector<1x128xf32>
    %9 = arith.mulf %5, %7 : vector<1x128xf32>
    %10 = arith.mulf %6, %8 : vector<1x128xf32>
    %11 = arith.subf %9, %10 : vector<1x128xf32>
    %12 = arith.truncf %11 : vector<1x128xf32> to vector<1x128xbf16>
    %c0_5 = arith.constant 0 : index
    %c0_6 = arith.constant 0 : index
    %13 = vector.load %arg4[%c0_5, %c0_6] : memref<1x128xbf16, #tpu.memory_space<vmem>>, vector<1x128xbf16>
    tpu.vector_store %arg4[%c0_5, %c0_6], %12 {strides = array<i32>} : memref<1x128xbf16, #tpu.memory_space<vmem>>, vector<1x128xbf16>,
    %14 = arith.mulf %6, %7 : vector<1x128xf32>
    %15 = arith.mulf %5, %8 : vector<1x128xf32>
    %16 = arith.addf %14, %15 : vector<1x128xf32>
    %17 = arith.truncf %16 : vector<1x128xf32> to vector<1x128xbf16>
    %c0_7 = arith.constant 0 : index
    %c0_8 = arith.constant 0 : index
    %18 = vector.load %arg5[%c0_7, %c0_8] : memref<1x128xbf16, #tpu.memory_space<vmem>>, vector<1x128xbf16>
    tpu.vector_store %arg5[%c0_7, %c0_8], %17 {strides = array<i32>} : memref<1x128xbf16, #tpu.memory_space<vmem>>, vector<1x128xbf16>,
    return
  }
  func.func @transform_0(%arg0: i32) -> (i32, i32) {
    %c0_i32 = arith.constant 0 : i32
    %c0_i32_0 = arith.constant 0 : i32
    %c0_i32_1 = arith.constant 0 : i32
    return %c0_i32, %c0_i32_0 : i32, i32
  }
  func.func @transform_1(%arg0: i32) -> (i32, i32) {
    %c0_i32 = arith.constant 0 : i32
    %c0_i32_0 = arith.constant 0 : i32
    %c0_i32_1 = arith.constant 0 : i32
    return %c0_i32, %c0_i32_0 : i32, i32
  }
  func.func @transform_2(%arg0: i32) -> (i32, i32) {
    %c0_i32 = arith.constant 0 : i32
    %c0_i32_0 = arith.constant 0 : i32
    %c0_i32_1 = arith.constant 0 : i32
    return %c0_i32, %c0_i32_0 : i32, i32
  }
  func.func @transform_3(%arg0: i32) -> (i32, i32) {
    %c0_i32 = arith.constant 0 : i32
    %c0_i32_0 = arith.constant 0 : i32
    return %arg0, %c0_i32 : i32, i32
  }
  func.func @transform_4(%arg0: i32) -> (i32, i32) {
    %c0_i32 = arith.constant 0 : i32
    %c0_i32_0 = arith.constant 0 : i32
    return %arg0, %c0_i32 : i32, i32
  }
}

</mosaic_0001>

<llo_original>
// kernel: tpu_custom_call.1
$region0: #{tpu_custom_call.1}
  #allocation0 [shape = 'u32[]', space=smem, size = 0x4, offset = 0x4, fixed_abs, tag = 'smem constant byte address 0x4 - core index']
  #allocation1 [shape = 'u32[144,128]{1,0:T(1,128)}', space=vmem, size = 0x12000, scoped, tag = 'internal scratch']
  %s0 = inlined_call_operand.hbm [shape: f32[1,128], index: 0, kind: input, shape index: {}]
  %s1 = inlined_call_operand.vmem [shape: f32[1,128], index: 1, kind: input, shape index: {}]
  %s2 = inlined_call_operand.vmem [shape: f32[1,128], index: 2, kind: input, shape index: {}]
  %s3 = inlined_call_operand.hbm [shape: bf16[1,128], index: 3, kind: output, shape index: {0}]
  %s4 = inlined_call_operand.hbm [shape: bf16[1,128], index: 4, kind: output, shape index: {1}]
  %5 = xla_tuple %s3, %s4
  %s6 = sld [smem:[#allocation0]]
  $region34: #{tpu_custom_call.1} parent=0
    _
  %s8 = ssub.s32 1, %s6
  %s9 = scalar_select 0, %s8, %s6
  $region1: #{tpu_custom_call.1} parent=0
    #allocation2 [shape = 'u8[512]{0}', space=vmem, size = 0x400, scoped, tag = 'input window, operand 0, single buffered']
    #allocation3 [shape = 's32[1]{0}', space=sflag, size = 0x4, scoped, tag = 'scoped memory for tpu_custom_call.1']
    #allocation4 [shape = 's32[1]{0}', space=sflag, size = 0x4, scoped, tag = 'scoped memory for tpu_custom_call.1']
    #allocation5 [shape = 'u8[512]{0}', space=vmem, size = 0x400, scoped, tag = 'output window, operand 0, single buffered']
    #allocation6 [shape = 'u8[512]{0}', space=vmem, size = 0x400, scoped, tag = 'output window, operand 1, single buffered']
    #allocation7 [shape = 's32[1]{0}', space=sflag, size = 0x4, scoped, tag = 'scoped memory for tpu_custom_call.1']
    %10 = vsyncpa [#allocation3], 0
    %11 = vsyncpa [#allocation4], 0
    %12 = vsyncpa [#allocation7], 0
    // Predicated region
    $region2: #{tpu_custom_call.1} parent=1 // pred_check
      _
    $region3: #{tpu_custom_call.1} parent=1 // pred_check_branch
      %14 = sbr.rel (0) target = $region5
    $region4: #{tpu_custom_call.1} parent=1 // pred_region
      %s16 = ssub.s32 16, 16
      %17 = vsyncadd [#allocation3], %s16
      %s19 = sshll.u32 [#allocation2], 4
      %s20 = int_to_ptr.vmem [resolvable:$true] %s19
      %22 = dma.hbm_to_vmem [thread:$0]  %s0, 16, %s20, [#allocation3]
    $region5: #{tpu_custom_call.1} parent=1 // pred_fallthru
      _
    // Predicated region
    $region6: #{tpu_custom_call.1} parent=1 // pred_check
      _
    $region7: #{tpu_custom_call.1} parent=1 // pred_check_branch
      %24 = sbr.rel (0) target = $region9
    $region8: #{tpu_custom_call.1} parent=1 // pred_region
      _
    $region9: #{tpu_custom_call.1} parent=1 // pred_fallthru
      _
    // Predicated region
    $region10: #{tpu_custom_call.1} parent=1 // pred_check
      _
    $region11: #{tpu_custom_call.1} parent=1 // pred_check_branch
      %26 = sbr.rel (0) target = $region13
    $region12: #{tpu_custom_call.1} parent=1 // pred_region
      _
    $region13: #{tpu_custom_call.1} parent=1 // pred_fallthru
      _
    // Predicated region
    $region14: #{tpu_custom_call.1} parent=1 // pred_check
      _
    $region15: #{tpu_custom_call.1} parent=1 // pred_check_branch
      %28 = sbr.rel (0) target = $region17
    $region16: #{tpu_custom_call.1} parent=1 // pred_region
      %29 = dma.done [#allocation3], 16
    $region17: #{tpu_custom_call.1} parent=1 // pred_fallthru
      _
    %s30 = smul.u32 0, 8
    %s31 = scvt.s32.f32 %s30
    %v32 = vld [vmem:[#allocation2] sm:$0x1]
    %v33 = vstv %s31
    %v34 = vmul.f32 %v33, %v32
    %v35 = vand.u32 2147483647, %v34
    %vm36 = vcmp.le.f32.partialorder %v35, 0.7853982
    %vm37 = vcmp.lt.s32.totalorder %v34, 0
    %v38 = vand.u32 %v34, 2139095040
    %v39 = vshrl.u32 %v38, 23
    %v40 = vsub.s32 %v39, 127
    %v41 = vand.u32 2147483647, %v34
    %v42 = vand.u32 %v41, 8388607
    %v43 = vor.u32 %v42, 8388608
    %v44 = vsub.s32 0, %v43
    %v45 = vadd.s32 %v40, 1
    %vm46 = vcmp.gt.s32.totalorder %v45, 0
    %v47 = vsel %vm46, %v45, 0
    %v48 = vshrl.u32 %v47, 5
    %v49 = vand.u32 %v47, 31
    %v50 = vsub.s32 32, %v49
    %v51 = vshrl.u32 683565275, %v50
    %v52 = vshll.u32 683565275, %v49
    %v53 = vshrl.u32 2475754826, %v50
    %v54 = vor.u32 %v52, %v53
    %v55 = vshll.u32 2475754826, %v49
    %v56 = vshrl.u32 2131351028, %v50
    %v57 = vor.u32 %v55, %v56
    %v58 = vshll.u32 2131351028, %v49
    %v59 = vshrl.u32 2102212464, %v50
    %v60 = vor.u32 %v58, %v59
    %v61 = vshll.u32 2102212464, %v49
    %v62 = vshrl.u32 920167782, %v50
    %v63 = vor.u32 %v61, %v62
    %v64 = vshll.u32 920167782, %v49
    %v65 = vshrl.u32 1326507024, %v50
    %v66 = vor.u32 %v64, %v65
    %vm67 = vcmp.lt.s32.totalorder %v48, 1
    %vm68 = vcmp.lt.s32.totalorder %v48, 2
    %vm69 = vcmp.lt.s32.totalorder %v48, 3
    %vm70 = vcmp.lt.s32.totalorder %v48, 4
    %v71 = vsel %vm67, %v51, %v54
    %v72 = vsel %vm70, %v60, 2102212464
    %v73 = vsel %vm69, %v57, %v72
    %v74 = vsel %vm68, %v71, %v73
    %v75 = vsel %vm67, %v54, %v57
    %v76 = vsel %vm70, %v63, 920167782
    %v77 = vsel %vm69, %v60, %v76
    %v78 = vsel %vm68, %v75, %v77
    %v79 = vsel %vm67, %v57, %v60
    %v80 = vsel %vm70, %v66, 1326507024
    %v81 = vsel %vm69, %v63, %v80
    %v82 = vsel %vm68, %v79, %v81
    %v83 = vshll.u32 %v43, 8
    %v84 = vmul.u32.u64.compose %v83, %v82
    %v85 = vextract.low.u32 %v84
    %v86 = vextract.high.u32 %v84
    %v87 = vmul.u32.u64.compose %v83, %v78
    %v88 = vextract.low.u32 %v87
    %v89 = vextract.high.u32 %v87
    %v90 = vmul.u32 %v83, %v74
    %v91 = vadd.s32 %v86, %v88
    %vm92 = vc.u32 %v86, %v88
    %v93 = vadd.s32 %v89, 1
    %v94 = vsel %vm92, %v93, %v89
    %v95 = vadd.s32 %v90, %v94
    %v96 = vadd.s32 %v95, 536870912
    %v97 = vshrl.u32 %v96, 30
    %v98 = vshll.u32 %v97, 30
    %v99 = vsub.s32 %v95, %v98
    %vm100 = vcmp.lt.s32.totalorder %v99, 0
    %v101 = vsub.s32 0, %v99
    %v102 = vsel %vm100, %v101, %v99
    %v103 = vclz %v102
    %v104 = vsub.s32 %v103, 2
    %vm105 = vcmp.gt.s32.totalorder 0, %v104
    %v106 = vsel %vm105, 0, %v104
    %v107 = vsub.s32 32, %v106
    %v108 = vshll.u32 %v99, %v106
    %v109 = vshrl.u32 %v91, %v107
    %v110 = vor.u32 %v108, %v109
    %v111 = vsub.s32 4294967266, %v106
    %v112 = vadd.s32 %v111, 127
    %v113 = vshll.u32 %v112, 23
    %v114 = vor.u32 4788187, %v113
    %v115 = vand.u32 2147483647, %v114
    %v117 = vcvt.s32.f32 %v110
    %v118 = vmul.f32 %v117, %v115
    %v119 = vxor.u32 %v118, 2147483648
    %v120 = vsel %vm37, %v119, %v118
    %v121 = vsub.s32 4, %v97
    %v122 = vsel %vm37, %v121, %v97
    %v123 = vsel %vm36, %v34, %v120
    %v124 = vsel %vm36, 0, %v122
    %v125 = vcosq.f32.pop %v123
    %v126 = vsinq.f32.pop %v123
    %vm127 = vweird.f32 %v34
    %v128 = vand.u32 %v124, 3
    %vm129 = vcmp.lt.s32.totalorder %v128, 2
    %vm130 = vcmp.eq.s32.totalorder %v128, 0
    %v131 = vxor.u32 %v126, 2147483648
    %v132 = vsel %vm130, %v125, %v131
    %vm133 = vcmp.eq.s32.totalorder %v128, 2
    %v134 = vxor.u32 %v125, 2147483648
    %v135 = vsel %vm133, %v134, %v126
    %v136 = vsel %vm129, %v132, %v135
    %v137 = vsel %vm127, nan, %v136
    %v138 = vand.u32 2147483647, %v34
    %vm139 = vcmp.le.f32.partialorder %v138, 0.7853982
    %vm140 = vcmp.lt.s32.totalorder %v34, 0
    %v141 = vand.u32 %v34, 2139095040
    %v142 = vshrl.u32 %v141, 23
    %v143 = vsub.s32 %v142, 127
    %v144 = vand.u32 2147483647, %v34
    %v145 = vand.u32 %v144, 8388607
    %v146 = vor.u32 %v145, 8388608
    %v147 = vsub.s32 0, %v146
    %v148 = vadd.s32 %v143, 1
    %vm149 = vcmp.gt.s32.totalorder %v148, 0
    %v150 = vsel %vm149, %v148, 0
    %v151 = vshrl.u32 %v150, 5
    %v152 = vand.u32 %v150, 31
    %v153 = vsub.s32 32, %v152
    %v154 = vshrl.u32 683565275, %v153
    %v155 = vshll.u32 683565275, %v152
    %v156 = vshrl.u32 2475754826, %v153
    %v157 = vor.u32 %v155, %v156
    %v158 = vshll.u32 2475754826, %v152
    %v159 = vshrl.u32 2131351028, %v153
    %v160 = vor.u32 %v158, %v159
    %v161 = vshll.u32 2131351028, %v152
    %v162 = vshrl.u32 2102212464, %v153
    %v163 = vor.u32 %v161, %v162
    %v164 = vshll.u32 2102212464, %v152
    %v165 = vshrl.u32 920167782, %v153
    %v166 = vor.u32 %v164, %v165
    %v167 = vshll.u32 920167782, %v152
    %v168 = vshrl.u32 1326507024, %v153
    %v169 = vor.u32 %v167, %v168
    %vm170 = vcmp.lt.s32.totalorder %v151, 1
    %vm171 = vcmp.lt.s32.totalorder %v151, 2
    %vm172 = vcmp.lt.s32.totalorder %v151, 3
    %vm173 = vcmp.lt.s32.totalorder %v151, 4
    %v174 = vsel %vm170, %v154, %v157
    %v175 = vsel %vm173, %v163, 2102212464
    %v176 = vsel %vm172, %v160, %v175
    %v177 = vsel %vm171, %v174, %v176
    %v178 = vsel %vm170, %v157, %v160
    %v179 = vsel %vm173, %v166, 920167782
    %v180 = vsel %vm172, %v163, %v179
    %v181 = vsel %vm171, %v178, %v180
    %v182 = vsel %vm170, %v160, %v163
    %v183 = vsel %vm173, %v169, 1326507024
    %v184 = vsel %vm172, %v166, %v183
    %v185 = vsel %vm171, %v182, %v184
    %v186 = vshll.u32 %v146, 8
    %v187 = vmul.u32.u64.compose %v186, %v185
    %v188 = vextract.low.u32 %v187
    %v189 = vextract.high.u32 %v187
    %v190 = vmul.u32.u64.compose %v186, %v181
    %v191 = vextract.low.u32 %v190
    %v192 = vextract.high.u32 %v190
    %v193 = vmul.u32 %v186, %v177
    %v194 = vadd.s32 %v189, %v191
    %vm195 = vc.u32 %v189, %v191
    %v196 = vadd.s32 %v192, 1
    %v197 = vsel %vm195, %v196, %v192
    %v198 = vadd.s32 %v193, %v197
    %v199 = vadd.s32 %v198, 536870912
    %v200 = vshrl.u32 %v199, 30
    %v201 = vshll.u32 %v200, 30
    %v202 = vsub.s32 %v198, %v201
    %vm203 = vcmp.lt.s32.totalorder %v202, 0
    %v204 = vsub.s32 0, %v202
    %v205 = vsel %vm203, %v204, %v202
    %v206 = vclz %v205
    %v207 = vsub.s32 %v206, 2
    %vm208 = vcmp.gt.s32.totalorder 0, %v207
    %v209 = vsel %vm208, 0, %v207
    %v210 = vsub.s32 32, %v209
    %v211 = vshll.u32 %v202, %v209
    %v212 = vshrl.u32 %v194, %v210
    %v213 = vor.u32 %v211, %v212
    %v214 = vsub.s32 4294967266, %v209
    %v215 = vadd.s32 %v214, 127
    %v216 = vshll.u32 %v215, 23
    %v217 = vor.u32 4788187, %v216
    %v218 = vand.u32 2147483647, %v217
    %v220 = vcvt.s32.f32 %v213
    %v221 = vmul.f32 %v220, %v218
    %v222 = vxor.u32 %v221, 2147483648
    %v223 = vsel %vm140, %v222, %v221
    %v224 = vsub.s32 4, %v200
    %v225 = vsel %vm140, %v224, %v200
    %v226 = vsel %vm139, %v34, %v223
    %v227 = vsel %vm139, 0, %v225
    %v228 = vcosq.f32.pop %v226
    %v229 = vsinq.f32.pop %v226
    %vm230 = vweird.f32 %v34
    %v231 = vadd.s32 %v227, 3
    %v232 = vand.u32 %v231, 3
    %vm233 = vcmp.lt.s32.totalorder %v232, 2
    %vm234 = vcmp.eq.s32.totalorder %v232, 0
    %v235 = vxor.u32 %v229, 2147483648
    %v236 = vsel %vm234, %v228, %v235
    %vm237 = vcmp.eq.s32.totalorder %v232, 2
    %v238 = vxor.u32 %v228, 2147483648
    %v239 = vsel %vm237, %v238, %v229
    %v240 = vsel %vm233, %v236, %v239
    %v241 = vsel %vm230, nan, %v240
    %v242 = vld [vmem:[%s1] sm:$0x1]
    %v243 = vld [vmem:[%s2] sm:$0x1]
    %v244 = vmul.f32 %v137, %v242
    %v245 = vmul.f32 %v241, %v243
    %v246 = vsub.f32 %v244, %v245
    %v247 = vpack.c.bf16 %v246, %v246
    %vm248 = vcmask 1040384
    %vm249 = vsmask.f32 256
    %vm250 = vmand %vm248, %vm249
    %v251 = vld [vmem:[#allocation5] sm:$0x1]
    %v252 = vsel %vm250, %v247, %v251
    %253 = vst [vmem:[#allocation5] sm:$0x1] %v252
    %v254 = vmul.f32 %v241, %v242
    %v255 = vmul.f32 %v137, %v243
    %v256 = vadd.f32 %v254, %v255
    %v257 = vpack.c.bf16 %v256, %v256
    %v258 = vld [vmem:[#allocation6] sm:$0x1]
    %v259 = vsel %vm250, %v257, %v258
    %260 = vst [vmem:[#allocation6] sm:$0x1] %v259
    // Predicated region
    $region18: #{tpu_custom_call.1} parent=1 // pred_check
      _
    $region19: #{tpu_custom_call.1} parent=1 // pred_check_branch
      %262 = sbr.rel (0) target = $region21
    $region20: #{tpu_custom_call.1} parent=1 // pred_region
      %s264 = ssub.s32 16, 16
      %265 = vsyncadd [#allocation4], %s264
      %s267 = sshll.u32 [#allocation5], 4
      %s268 = int_to_ptr.vmem [resolvable:$true] %s267
      %270 = dma.vmem_to_hbm [thread:$0]  %s268, 16, %s3, [#allocation4]
    $region21: #{tpu_custom_call.1} parent=1 // pred_fallthru
      _
    // Predicated region
    $region22: #{tpu_custom_call.1} parent=1 // pred_check
      _
    $region23: #{tpu_custom_call.1} parent=1 // pred_check_branch
      %272 = sbr.rel (0) target = $region25
    $region24: #{tpu_custom_call.1} parent=1 // pred_region
      %s274 = ssub.s32 16, 16
      %275 = vsyncadd [#allocation7], %s274
      %s277 = sshll.u32 [#allocation6], 4
      %s278 = int_to_ptr.vmem [resolvable:$true] %s277
      %280 = dma.vmem_to_hbm [thread:$0]  %s278, 16, %s4, [#allocation7]
    $region25: #{tpu_custom_call.1} parent=1 // pred_fallthru
      _
    // Predicated region
    $region26: #{tpu_custom_call.1} parent=1 // pred_check
      _
    $region27: #{tpu_custom_call.1} parent=1 // pred_check_branch
      %282 = sbr.rel (0) target = $region29
    $region28: #{tpu_custom_call.1} parent=1 // pred_region
      %283 = dma.done [#allocation4], 16
    $region29: #{tpu_custom_call.1} parent=1 // pred_fallthru
      _
    // Predicated region
    $region30: #{tpu_custom_call.1} parent=1 // pred_check
      _
    $region31: #{tpu_custom_call.1} parent=1 // pred_check_branch
      %285 = sbr.rel (0) target = $region33
    $region32: #{tpu_custom_call.1} parent=1 // pred_region
      %286 = dma.done [#allocation7], 16
    $region33: #{tpu_custom_call.1} parent=1 // pred_fallthru
      _
    %287 = vsyncpa [#allocation3], 1
    %288 = vsyncpa [#allocation4], 1
    %289 = vsyncpa [#allocation7], 1

</llo_original>
